<compile_context>
chip_gen: v6e
topology: v6e:2x2x1
jax: 0.10.0
libtpu: 0.0.40
codegen_flags: <defaults>
</compile_context>

<pallas_src>
import jax
import jax.numpy as jnp
from jax.experimental import pallas as pl
from jax.experimental.pallas import tpu as pltpu

MXU_DTYPE = jnp.bfloat16   # MXU operand dtype (f32 accumulation); native on v5e/v6e/v7x.
BN_EPS = 1e-5


# ----------------------------------------------------------------------------
# Pallas kernel: fused 4-layer MLP forward on one batch tile (feature-major)
# ----------------------------------------------------------------------------
def goal_mlp_kernel(x_ref,
                    w1_ref, b1_ref, w2_ref, b2_ref,
                    w3_ref, b3_ref, w4_ref, b4_ref,
                    o_ref):
    """x_ref: (D, TB) bf16.  wK_ref: (out, in) bf16.  bK_ref: (out, 1) f32.
    o_ref: (1, TB) f32.  BN affines are pre-folded into w/b by the wrapper."""
    h = jnp.dot(w1_ref[...], x_ref[...], preferred_element_type=jnp.float32)
    h = jnp.maximum(h + b1_ref[...], 0.0)                       # (128, TB)

    h = jnp.dot(w2_ref[...], h.astype(w2_ref.dtype),
                preferred_element_type=jnp.float32)
    h = jnp.maximum(h + b2_ref[...], 0.0)                       # (64, TB)

    h = jnp.dot(w3_ref[...], h.astype(w3_ref.dtype),
                preferred_element_type=jnp.float32)
    h = jnp.maximum(h + b3_ref[...], 0.0)                       # (32, TB)

    z = jnp.dot(w4_ref[...], h.astype(w4_ref.dtype),
                preferred_element_type=jnp.float32) + b4_ref[...]   # (1, TB)

    # Sigmoid via EUP exp + approximate reciprocal (EUP slot is otherwise idle).
    o_ref[...] = pl.reciprocal(1.0 + jnp.exp(-z), approx=True)


# ----------------------------------------------------------------------------
# Wrapper
# ----------------------------------------------------------------------------
def _round_up(n, m):
    return ((n + m - 1) // m) * m


def goal_prediction_forward(x, kernel_params, *, batch_tile=512):
    """Fused eval-mode forward.  x: (B, input_dim) f32 -> (B, 1) f32."""
    B, D = x.shape
    # Batch tile: multiple of 128 (lane width); ~512 rows reaches the measured
    # HBM-roofline regime while staying far under the v7x VMEM budget.
    tb = min(batch_tile, _round_up(B, 128))
    b_pad = _round_up(B, tb)

    # Feature-major layout: batch on the lane axis; zero-pad the ragged tail
    # (padded columns are sliced off below).
    x_t = jnp.zeros((D, b_pad), MXU_DTYPE).at[:, :B].set(x.T.astype(MXU_DTYPE))

    grid = (b_pad // tb,)
    x_spec = pl.BlockSpec((D, tb), lambda i: (0, i))
    out_spec = pl.BlockSpec((1, tb), lambda i: (0, i))
    # Weights/biases: full-shape blocks, constant index_map -> resident in VMEM.
    param_specs = [pl.BlockSpec(p.shape, lambda i: (0, 0)) for p in kernel_params]

    flops = 2 * b_pad * (D * 128 + 128 * 64 + 64 * 32 + 32 * 1)
    bytes_accessed = (x_t.size * x_t.dtype.itemsize + b_pad * 4
                      + sum(int(p.size) * p.dtype.itemsize for p in kernel_params))

    out_t = pl.pallas_call(
        goal_mlp_kernel,
        out_shape=jax.ShapeDtypeStruct((1, b_pad), jnp.float32),
        grid=grid,
        in_specs=[x_spec] + param_specs,
        out_specs=out_spec,
        compiler_params=pltpu.CompilerParams(
            dimension_semantics=("parallel",)),       # megacore sharding on v7x
        cost_estimate=pl.CostEstimate(
            flops=flops, transcendentals=b_pad, bytes_accessed=bytes_accessed),
    )(x_t, *kernel_params)

    return out_t[:, :B].T                              # (B, 1)


# ----------------------------------------------------------------------------
# Parameter construction (PyTorch-layout raw params) + wrapper-side folding
# ----------------------------------------------------------------------------
def make_params(key, input_dim):
    """Raw module parameters: [(W (in,out), b (out,), bn or None)], eval-mode BN."""
    dims = [(input_dim, 128), (128, 64), (64, 32), (32, 1)]
    keys = jax.random.split(key, 4 * 6)
    layers = []
    ki = 0
    for li, (fan_in, fan_out) in enumerate(dims):
        bound = 1.0 / jnp.sqrt(jnp.float32(fan_in))
        w = jax.random.uniform(keys[ki], (fan_in, fan_out), jnp.float32,
                               -bound, bound); ki += 1
        b = jax.random.uniform(keys[ki], (fan_out,), jnp.float32,
                               -bound, bound); ki += 1
        bn = None
        if li < 3:  # BatchNorm1d after the first three Linear+ReLU stages
            gamma = 1.0 + 0.1 * jax.random.normal(keys[ki], (fan_out,), jnp.float32); ki += 1
            beta = 0.1 * jax.random.normal(keys[ki], (fan_out,), jnp.float32); ki += 1
            mean = 0.1 * jax.random.normal(keys[ki], (fan_out,), jnp.float32); ki += 1
            var = 1.0 + 0.1 * jax.random.uniform(keys[ki], (fan_out,), jnp.float32); ki += 1
            bn = (gamma, beta, mean, var)
        layers.append((w, b, bn))
    return layers


def fold_and_transpose(layers, mxu_dtype=MXU_DTYPE, eps=BN_EPS):
    """Fold the eval-mode BN affine of layer i into Linear i+1 and transpose to
    (out, in) for the feature-major kernel.  Exact for any sign of the folded
    scale because BN is applied AFTER the ReLU."""
    params = []
    pend_s = pend_t = None
    for (w, b, bn) in layers:
        if pend_s is not None:
            b = b + pend_t @ w               # uses the ORIGINAL w
            w = w * pend_s[:, None]          # scale input columns
        params.append(w.T.astype(mxu_dtype))                   # (out, in) bf16
        params.append(b.reshape(-1, 1).astype(jnp.float32))    # (out, 1)  f32
        if bn is not None:
            gamma, beta, mean, var = bn
            s = gamma / jnp.sqrt(var + eps)
            t = beta - mean * s
            pend_s, pend_t = s, t
        else:
            pend_s = pend_t = None
    return tuple(params)


def reference_forward(x, layers, eps=BN_EPS):
    """Exact f32 eval-mode forward of the PyTorch module."""
    h = x
    for (w, b, bn) in layers:
        h = h @ w + b
        if bn is not None:
            h = jnp.maximum(h, 0.0)
            gamma, beta, mean, var = bn
            h = (h - mean) / jnp.sqrt(var + eps) * gamma + beta
            # Dropout(0.3): identity in eval mode
    return jax.nn.sigmoid(h)


def mixed_reference(x, kernel_params, mxu_dtype=MXU_DTYPE):
    """Same math/casts as the kernel, but with an exact sigmoid (plain JAX)."""
    w1, b1, w2, b2, w3, b3, w4, b4 = kernel_params
    h = x.T.astype(mxu_dtype)
    h = jnp.maximum(jnp.dot(w1, h, preferred_element_type=jnp.float32) + b1, 0.0)
    h = jnp.maximum(jnp.dot(w2, h.astype(mxu_dtype),
                            preferred_element_type=jnp.float32) + b2, 0.0)
    h = jnp.maximum(jnp.dot(w3, h.astype(mxu_dtype),
                            preferred_element_type=jnp.float32) + b3, 0.0)
    z = jnp.dot(w4, h.astype(mxu_dtype), preferred_element_type=jnp.float32) + b4
    return jax.nn.sigmoid(z).T


if __name__ == "__main__":
    key = jax.random.PRNGKey(0)
    k_x, k_p = jax.random.split(key)

    batch, input_dim = 8, 16
    x = jax.random.normal(k_x, (batch, input_dim), jnp.float32)
    layers = make_params(k_p, input_dim)
    kernel_params = fold_and_transpose(layers)

    out = jax.block_until_ready(goal_prediction_forward(x, kernel_params))
    assert out.shape == (batch, 1)

    # Tight check vs a reference using the identical bf16 MXU casting (the only
    # intentional delta is the EUP approximate reciprocal in the sigmoid).
    ref_mixed = mixed_reference(x, kernel_params)
    assert jnp.allclose(out, ref_mixed, atol=1e-2, rtol=1e-2), \
        "mismatch vs mixed-precision reference"

    # Sanity check vs the exact f32 eval-mode module semantics
    # (difference = bf16 MXU operands + approximate-reciprocal sigmoid).
    ref_exact = reference_forward(x, layers)
    assert jnp.allclose(out, ref_exact, atol=3e-2, rtol=3e-2), \
        "mismatch vs f32 reference"

    print("KERNEL_OK")
</pallas_src>

<mosaic_0001>
module attributes {stable_mosaic.version = 11 : i64} {
  func.func @goal_mlp_kernel(%arg0: i32, %arg1: memref<16x128xbf16, #tpu.memory_space<vmem>>, %arg2: memref<128x16xbf16, #tpu.memory_space<vmem>>, %arg3: memref<128x1xf32, #tpu.memory_space<vmem>>, %arg4: memref<64x128xbf16, #tpu.memory_space<vmem>>, %arg5: memref<64x1xf32, #tpu.memory_space<vmem>>, %arg6: memref<32x64xbf16, #tpu.memory_space<vmem>>, %arg7: memref<32x1xf32, #tpu.memory_space<vmem>>, %arg8: memref<1x32xbf16, #tpu.memory_space<vmem>>, %arg9: memref<1x1xf32, #tpu.memory_space<vmem>>, %arg10: memref<1x128xf32, #tpu.memory_space<vmem>>) attributes {dimension_semantics = [#tpu.dimension_semantics<parallel>], iteration_bounds = array<i64: 1>, scalar_prefetch = 0 : i64, scratch_operands = 0 : i64, tpu.core_type = #tpu.core_type<tc>, window_params = [{transform_indices = @transform_0, window_bounds = array<i64: 16, 128>}, {pipeline_mode = #tpu.pipeline_mode<synchronous>, transform_indices = @transform_1, window_bounds = array<i64: 128, 16>}, {pipeline_mode = #tpu.pipeline_mode<synchronous>, transform_indices = @transform_2, window_bounds = array<i64: 128, 1>}, {pipeline_mode = #tpu.pipeline_mode<synchronous>, transform_indices = @transform_3, window_bounds = array<i64: 64, 128>}, {pipeline_mode = #tpu.pipeline_mode<synchronous>, transform_indices = @transform_4, window_bounds = array<i64: 64, 1>}, {pipeline_mode = #tpu.pipeline_mode<synchronous>, transform_indices = @transform_5, window_bounds = array<i64: 32, 64>}, {pipeline_mode = #tpu.pipeline_mode<synchronous>, transform_indices = @transform_6, window_bounds = array<i64: 32, 1>}, {pipeline_mode = #tpu.pipeline_mode<synchronous>, transform_indices = @transform_7, window_bounds = array<i64: 1, 32>}, {pipeline_mode = #tpu.pipeline_mode<synchronous>, transform_indices = @transform_8, window_bounds = array<i64: 1, 1>}, {transform_indices = @transform_9, window_bounds = array<i64: 1, 128>}]} {
    %c0 = arith.constant 0 : index
    %c0_0 = arith.constant 0 : index
    %0 = vector.load %arg2[%c0, %c0_0] : memref<128x16xbf16, #tpu.memory_space<vmem>>, vector<128x16xbf16>
    %c0_1 = arith.constant 0 : index
    %c0_2 = arith.constant 0 : index
    %1 = vector.load %arg1[%c0_1, %c0_2] : memref<16x128xbf16, #tpu.memory_space<vmem>>, vector<16x128xbf16>
    %cst = arith.constant dense<0.000000e+00> : vector<128x128xf32>
    %2 = tpu.matmul %0, %1, %cst {dimension_numbers = #tpu.dot_dimension_numbers<[1], [0], [0], [1], [0, 0, 1, 1], [], []>} : vector<128x16xbf16>, vector<16x128xbf16>, vector<128x128xf32> -> vector<128x128xf32>
    %c0_3 = arith.constant 0 : index
    %c0_4 = arith.constant 0 : index
    %3 = vector.load %arg3[%c0_3, %c0_4] : memref<128x1xf32, #tpu.memory_space<vmem>>, vector<128x1xf32>
    %4 = vector.broadcast %3 : vector<128x1xf32> to vector<128x128xf32>
    %5 = arith.addf %2, %4 : vector<128x128xf32>
    %cst_5 = arith.constant 0.000000e+00 : f32
    %6 = vector.broadcast %cst_5 : f32 to vector<128x128xf32>
    %7 = arith.maximumf %5, %6 : vector<128x128xf32>
    %c0_6 = arith.constant 0 : index
    %c0_7 = arith.constant 0 : index
    %8 = vector.load %arg4[%c0_6, %c0_7] : memref<64x128xbf16, #tpu.memory_space<vmem>>, vector<64x128xbf16>
    %9 = arith.truncf %7 : vector<128x128xf32> to vector<128x128xbf16>
    %cst_8 = arith.constant dense<0.000000e+00> : vector<64x128xf32>
    %10 = tpu.matmul %8, %9, %cst_8 {dimension_numbers = #tpu.dot_dimension_numbers<[1], [0], [0], [1], [0, 0, 1, 1], [], []>} : vector<64x128xbf16>, vector<128x128xbf16>, vector<64x128xf32> -> vector<64x128xf32>
    %c0_9 = arith.constant 0 : index
    %c0_10 = arith.constant 0 : index
    %11 = vector.load %arg5[%c0_9, %c0_10] : memref<64x1xf32, #tpu.memory_space<vmem>>, vector<64x1xf32>
    %12 = vector.broadcast %11 : vector<64x1xf32> to vector<64x128xf32>
    %13 = arith.addf %10, %12 : vector<64x128xf32>
    %cst_11 = arith.constant 0.000000e+00 : f32
    %14 = vector.broadcast %cst_11 : f32 to vector<64x128xf32>
    %15 = arith.maximumf %13, %14 : vector<64x128xf32>
    %c0_12 = arith.constant 0 : index
    %c0_13 = arith.constant 0 : index
    %16 = vector.load %arg6[%c0_12, %c0_13] : memref<32x64xbf16, #tpu.memory_space<vmem>>, vector<32x64xbf16>
    %17 = arith.truncf %15 : vector<64x128xf32> to vector<64x128xbf16>
    %cst_14 = arith.constant dense<0.000000e+00> : vector<32x128xf32>
    %18 = tpu.matmul %16, %17, %cst_14 {dimension_numbers = #tpu.dot_dimension_numbers<[1], [0], [0], [1], [0, 0, 1, 1], [], []>} : vector<32x64xbf16>, vector<64x128xbf16>, vector<32x128xf32> -> vector<32x128xf32>
    %c0_15 = arith.constant 0 : index
    %c0_16 = arith.constant 0 : index
    %19 = vector.load %arg7[%c0_15, %c0_16] : memref<32x1xf32, #tpu.memory_space<vmem>>, vector<32x1xf32>
    %20 = vector.broadcast %19 : vector<32x1xf32> to vector<32x128xf32>
    %21 = arith.addf %18, %20 : vector<32x128xf32>
    %cst_17 = arith.constant 0.000000e+00 : f32
    %22 = vector.broadcast %cst_17 : f32 to vector<32x128xf32>
    %23 = arith.maximumf %21, %22 : vector<32x128xf32>
    %c0_18 = arith.constant 0 : index
    %c0_19 = arith.constant 0 : index
    %24 = vector.load %arg8[%c0_18, %c0_19] : memref<1x32xbf16, #tpu.memory_space<vmem>>, vector<1x32xbf16>
    %25 = arith.truncf %23 : vector<32x128xf32> to vector<32x128xbf16>
    %cst_20 = arith.constant dense<0.000000e+00> : vector<1x128xf32>
    %26 = tpu.matmul %24, %25, %cst_20 {dimension_numbers = #tpu.dot_dimension_numbers<[1], [0], [0], [1], [0, 0, 1, 1], [], []>} : vector<1x32xbf16>, vector<32x128xbf16>, vector<1x128xf32> -> vector<1x128xf32>
    %c0_21 = arith.constant 0 : index
    %c0_22 = arith.constant 0 : index
    %27 = vector.load %arg9[%c0_21, %c0_22] : memref<1x1xf32, #tpu.memory_space<vmem>>, vector<1x1xf32>
    %28 = vector.broadcast %27 : vector<1x1xf32> to vector<1x128xf32>
    %29 = arith.addf %26, %28 : vector<1x128xf32>
    %cst_23 = arith.constant 0.000000e+00 : f32
    %30 = vector.broadcast %cst_23 : f32 to vector<1x128xf32>
    %31 = arith.subf %30, %29 : vector<1x128xf32>
    %32 = math.exp %31 : vector<1x128xf32>
    %cst_24 = arith.constant 1.000000e+00 : f32
    %33 = vector.broadcast %cst_24 : f32 to vector<1x128xf32>
    %34 = arith.addf %33, %32 : vector<1x128xf32>
    %35 = tpu.reciprocal %34 {approx = true} : vector<1x128xf32> -> vector<1x128xf32>
    %c0_25 = arith.constant 0 : index
    %c0_26 = arith.constant 0 : index
    %36 = vector.load %arg10[%c0_25, %c0_26] : memref<1x128xf32, #tpu.memory_space<vmem>>, vector<1x128xf32>
    tpu.vector_store %arg10[%c0_25, %c0_26], %35 {strides = array<i32>} : memref<1x128xf32, #tpu.memory_space<vmem>>, vector<1x128xf32>,
    return
  }
  func.func @transform_0(%arg0: i32) -> (i32, i32) {
    %c0_i32 = arith.constant 0 : i32
    %c0_i32_0 = arith.constant 0 : i32
    return %c0_i32, %arg0 : i32, i32
  }
  func.func @transform_1(%arg0: i32) -> (i32, i32) {
    %c0_i32 = arith.constant 0 : i32
    %c0_i32_0 = arith.constant 0 : i32
    %c0_i32_1 = arith.constant 0 : i32
    return %c0_i32, %c0_i32_0 : i32, i32
  }
  func.func @transform_2(%arg0: i32) -> (i32, i32) {
    %c0_i32 = arith.constant 0 : i32
    %c0_i32_0 = arith.constant 0 : i32
    %c0_i32_1 = arith.constant 0 : i32
    return %c0_i32, %c0_i32_0 : i32, i32
  }
  func.func @transform_3(%arg0: i32) -> (i32, i32) {
    %c0_i32 = arith.constant 0 : i32
    %c0_i32_0 = arith.constant 0 : i32
    %c0_i32_1 = arith.constant 0 : i32
    return %c0_i32, %c0_i32_0 : i32, i32
  }
  func.func @transform_4(%arg0: i32) -> (i32, i32) {
    %c0_i32 = arith.constant 0 : i32
    %c0_i32_0 = arith.constant 0 : i32
    %c0_i32_1 = arith.constant 0 : i32
    return %c0_i32, %c0_i32_0 : i32, i32
  }
  func.func @transform_5(%arg0: i32) -> (i32, i32) {
    %c0_i32 = arith.constant 0 : i32
    %c0_i32_0 = arith.constant 0 : i32
    %c0_i32_1 = arith.constant 0 : i32
    return %c0_i32, %c0_i32_0 : i32, i32
  }
  func.func @transform_6(%arg0: i32) -> (i32, i32) {
    %c0_i32 = arith.constant 0 : i32
    %c0_i32_0 = arith.constant 0 : i32
    %c0_i32_1 = arith.constant 0 : i32
    return %c0_i32, %c0_i32_0 : i32, i32
  }
  func.func @transform_7(%arg0: i32) -> (i32, i32) {
    %c0_i32 = arith.constant 0 : i32
    %c0_i32_0 = arith.constant 0 : i32
    %c0_i32_1 = arith.constant 0 : i32
    return %c0_i32, %c0_i32_0 : i32, i32
  }
  func.func @transform_8(%arg0: i32) -> (i32, i32) {
    %c0_i32 = arith.constant 0 : i32
    %c0_i32_0 = arith.constant 0 : i32
    %c0_i32_1 = arith.constant 0 : i32
    return %c0_i32, %c0_i32_0 : i32, i32
  }
  func.func @transform_9(%arg0: i32) -> (i32, i32) {
    %c0_i32 = arith.constant 0 : i32
    %c0_i32_0 = arith.constant 0 : i32
    return %c0_i32, %arg0 : i32, i32
  }
}

</mosaic_0001>

<llo_original>
// kernel: tpu_custom_call.1
$region0: #{tpu_custom_call.1}
  #allocation0 [shape = 'u32[]', space=smem, size = 0x4, offset = 0x4, fixed_abs, tag = 'smem constant byte address 0x4 - core index']
  #allocation1 [shape = 'u32[144,128]{1,0:T(1,128)}', space=vmem, size = 0x12000, scoped, tag = 'internal scratch']
  #allocation2 [shape = 'f32[1,1]{1,0:T(1,128)S(1)}', space=vmem, size = 0x200, scoped, tag = 'scoped memory for tpu_custom_call.1']
  %s0 = inlined_call_operand.vmem [shape: bf16[16,128], index: 0, kind: input, shape index: {}]
  %s1 = inlined_call_operand.vmem [shape: bf16[128,16], index: 1, kind: input, shape index: {}]
  %s2 = inlined_call_operand.vmem [shape: f32[128,1], index: 2, kind: input, shape index: {}]
  %s3 = inlined_call_operand.vmem [shape: bf16[64,128], index: 3, kind: input, shape index: {}]
  %s4 = inlined_call_operand.vmem [shape: f32[64,1], index: 4, kind: input, shape index: {}]
  %s5 = inlined_call_operand.vmem [shape: bf16[32,64], index: 5, kind: input, shape index: {}]
  %s6 = inlined_call_operand.vmem [shape: f32[32,1], index: 6, kind: input, shape index: {}]
  %s7 = inlined_call_operand.vmem [shape: bf16[1,32], index: 7, kind: input, shape index: {}]
  %s8 = inlined_call_operand.<no memory space> [shape: f32[1,1], index: 8, kind: input, shape index: {}]
  %s9 = inlined_call_operand.hbm [shape: f32[1,128], index: 9, kind: output, shape index: {}]
  %s10 = sld [smem:[#allocation0]]
  $region46: #{tpu_custom_call.1} parent=0
    _
  %s12 = ssub.s32 1, %s10
  %s13 = scalar_select 0, %s12, %s10
  %v14 = vstv %s8
  %15 = vst [vmem:[#allocation2] sm:$0x1] %v14
  $region1: #{tpu_custom_call.1} parent=0
    #allocation3 [shape = 'u8[512]{0}', space=vmem, size = 0x400, scoped, tag = 'output window, operand 0, single buffered']
    #allocation4 [shape = 's32[1]{0}', space=sflag, size = 0x4, scoped, tag = 'scoped memory for tpu_custom_call.1']
    %16 = vsyncpa [#allocation4], 0
    // Predicated region
    $region2: #{tpu_custom_call.1} parent=1 // pred_check
      _
    $region3: #{tpu_custom_call.1} parent=1 // pred_check_branch
      %18 = sbr.rel (0) target = $region5
    $region4: #{tpu_custom_call.1} parent=1 // pred_region
      _
    $region5: #{tpu_custom_call.1} parent=1 // pred_fallthru
      _
    // Predicated region
    $region6: #{tpu_custom_call.1} parent=1 // pred_check
      _
    $region7: #{tpu_custom_call.1} parent=1 // pred_check_branch
      %20 = sbr.rel (0) target = $region9
    $region8: #{tpu_custom_call.1} parent=1 // pred_region
      _
    $region9: #{tpu_custom_call.1} parent=1 // pred_fallthru
      _
    // Predicated region
    $region10: #{tpu_custom_call.1} parent=1 // pred_check
      _
    $region11: #{tpu_custom_call.1} parent=1 // pred_check_branch
      %22 = sbr.rel (0) target = $region13
    $region12: #{tpu_custom_call.1} parent=1 // pred_region
      _
    $region13: #{tpu_custom_call.1} parent=1 // pred_fallthru
      _
    // Predicated region
    $region14: #{tpu_custom_call.1} parent=1 // pred_check
      _
    $region15: #{tpu_custom_call.1} parent=1 // pred_check_branch
      %24 = sbr.rel (0) target = $region17
    $region16: #{tpu_custom_call.1} parent=1 // pred_region
      _
    $region17: #{tpu_custom_call.1} parent=1 // pred_fallthru
      _
    // Predicated region
    $region18: #{tpu_custom_call.1} parent=1 // pred_check
      _
    $region19: #{tpu_custom_call.1} parent=1 // pred_check_branch
      %26 = sbr.rel (0) target = $region21
    $region20: #{tpu_custom_call.1} parent=1 // pred_region
      _
    $region21: #{tpu_custom_call.1} parent=1 // pred_fallthru
      _
    // Predicated region
    $region22: #{tpu_custom_call.1} parent=1 // pred_check
      _
    $region23: #{tpu_custom_call.1} parent=1 // pred_check_branch
      %28 = sbr.rel (0) target = $region25
    $region24: #{tpu_custom_call.1} parent=1 // pred_region
      _
    $region25: #{tpu_custom_call.1} parent=1 // pred_fallthru
      _
    // Predicated region
    $region26: #{tpu_custom_call.1} parent=1 // pred_check
      _
    $region27: #{tpu_custom_call.1} parent=1 // pred_check_branch
      %30 = sbr.rel (0) target = $region29
    $region28: #{tpu_custom_call.1} parent=1 // pred_region
      _
    $region29: #{tpu_custom_call.1} parent=1 // pred_fallthru
      _
    // Predicated region
    $region30: #{tpu_custom_call.1} parent=1 // pred_check
      _
    $region31: #{tpu_custom_call.1} parent=1 // pred_check_branch
      %32 = sbr.rel (0) target = $region33
    $region32: #{tpu_custom_call.1} parent=1 // pred_region
      _
    $region33: #{tpu_custom_call.1} parent=1 // pred_fallthru
      _
    // Predicated region
    $region34: #{tpu_custom_call.1} parent=1 // pred_check
      _
    $region35: #{tpu_custom_call.1} parent=1 // pred_check_branch
      %34 = sbr.rel (0) target = $region37
    $region36: #{tpu_custom_call.1} parent=1 // pred_region
      _
    $region37: #{tpu_custom_call.1} parent=1 // pred_fallthru
      _
    %v36 = vld [vmem:[%s1] sm:$0xf]
    %v37 = vld [vmem:[%s1 + $0x4] sm:$0xf]
    %v38 = vld [vmem:[%s1 + $0x8] sm:$0xf]
    %v39 = vld [vmem:[%s1 + $0xc] sm:$0xf]
    %v40 = vld [vmem:[%s1 + $0x10] sm:$0xf]
    %v41 = vld [vmem:[%s1 + $0x14] sm:$0xf]
    %v42 = vld [vmem:[%s1 + $0x18] sm:$0xf]
    %v43 = vld [vmem:[%s1 + $0x1c] sm:$0xf]
    %v44 = vld [vmem:[%s1 + $0x20] sm:$0xf]
    %v45 = vld [vmem:[%s1 + $0x24] sm:$0xf]
    %v46 = vld [vmem:[%s1 + $0x28] sm:$0xf]
    %v47 = vld [vmem:[%s1 + $0x2c] sm:$0xf]
    %v48 = vld [vmem:[%s1 + $0x30] sm:$0xf]
    %v49 = vld [vmem:[%s1 + $0x34] sm:$0xf]
    %v50 = vld [vmem:[%s1 + $0x38] sm:$0xf]
    %v51 = vld [vmem:[%s1 + $0x3c] sm:$0xf]
    %v52 = vld [vmem:[%s0] sm:$0xf]
    %v53 = vld [vmem:[%s0 + $0x4] sm:$0xf]
    %v54 = vld [vmem:[%s2] sm:$0xff]
    %v55 = vld [vmem:[%s2 + $0x8] sm:$0xff]
    %v56 = vld [vmem:[%s2 + $0x10] sm:$0xff]
    %v57 = vld [vmem:[%s2 + $0x18] sm:$0xff]
    %v58 = vld [vmem:[%s2 + $0x20] sm:$0xff]
    %v59 = vld [vmem:[%s2 + $0x28] sm:$0xff]
    %v60 = vld [vmem:[%s2 + $0x30] sm:$0xff]
    %v61 = vld [vmem:[%s2 + $0x38] sm:$0xff]
    %v62 = vld [vmem:[%s2 + $0x40] sm:$0xff]
    %v63 = vld [vmem:[%s2 + $0x48] sm:$0xff]
    %v64 = vld [vmem:[%s2 + $0x50] sm:$0xff]
    %v65 = vld [vmem:[%s2 + $0x58] sm:$0xff]
    %v66 = vld [vmem:[%s2 + $0x60] sm:$0xff]
    %v67 = vld [vmem:[%s2 + $0x68] sm:$0xff]
    %v68 = vld [vmem:[%s2 + $0x70] sm:$0xff]
    %v69 = vld [vmem:[%s2 + $0x78] sm:$0xff]
    %71 = vset.pattern.permute.xlu0 0
    %72 = vperm.xlu0 %71, %v54
    %v73 = vpop.permute.xlu0 %72
    %76 = vset.pattern.permute.xlu0 0
    %77 = vperm.xlu0 %76, %v55
    %v78 = vpop.permute.xlu0 %77
    %81 = vset.pattern.permute.xlu0 0
    %82 = vperm.xlu0 %81, %v56
    %v83 = vpop.permute.xlu0 %82
    %86 = vset.pattern.permute.xlu0 0
    %87 = vperm.xlu0 %86, %v57
    %v88 = vpop.permute.xlu0 %87
    %91 = vset.pattern.permute.xlu0 0
    %92 = vperm.xlu0 %91, %v58
    %v93 = vpop.permute.xlu0 %92
    %96 = vset.pattern.permute.xlu0 0
    %97 = vperm.xlu0 %96, %v59
    %v98 = vpop.permute.xlu0 %97
    %101 = vset.pattern.permute.xlu0 0
    %102 = vperm.xlu0 %101, %v60
    %v103 = vpop.permute.xlu0 %102
    %106 = vset.pattern.permute.xlu0 0
    %107 = vperm.xlu0 %106, %v61
    %v108 = vpop.permute.xlu0 %107
    %111 = vset.pattern.permute.xlu0 0
    %112 = vperm.xlu0 %111, %v62
    %v113 = vpop.permute.xlu0 %112
    %116 = vset.pattern.permute.xlu0 0
    %117 = vperm.xlu0 %116, %v63
    %v118 = vpop.permute.xlu0 %117
    %121 = vset.pattern.permute.xlu0 0
    %122 = vperm.xlu0 %121, %v64
    %v123 = vpop.permute.xlu0 %122
    %126 = vset.pattern.permute.xlu0 0
    %127 = vperm.xlu0 %126, %v65
    %v128 = vpop.permute.xlu0 %127
    %131 = vset.pattern.permute.xlu0 0
    %132 = vperm.xlu0 %131, %v66
    %v133 = vpop.permute.xlu0 %132
    %136 = vset.pattern.permute.xlu0 0
    %137 = vperm.xlu0 %136, %v67
    %v138 = vpop.permute.xlu0 %137
    %141 = vset.pattern.permute.xlu0 0
    %142 = vperm.xlu0 %141, %v68
    %v143 = vpop.permute.xlu0 %142
    %146 = vset.pattern.permute.xlu0 0
    %147 = vperm.xlu0 %146, %v69
    %v148 = vpop.permute.xlu0 %147
    %v166 = vunpack.c.l.b16 %v36
    %v167 = vunpack.c.l.b16 %v37
    %v168 = vunpack.c.l.b16 %v38
    %v169 = vunpack.c.l.b16 %v39
    %v170 = vunpack.c.l.b16 %v40
    %v171 = vunpack.c.l.b16 %v41
    %v172 = vunpack.c.l.b16 %v42
    %v173 = vunpack.c.l.b16 %v43
    %v174 = vunpack.c.l.b16 %v44
    %v175 = vunpack.c.l.b16 %v45
    %v176 = vunpack.c.l.b16 %v46
    %v177 = vunpack.c.l.b16 %v47
    %v178 = vunpack.c.l.b16 %v48
    %v179 = vunpack.c.l.b16 %v49
    %v180 = vunpack.c.l.b16 %v50
    %v181 = vunpack.c.l.b16 %v51
    %v182 = vpack.c.b16 %v167, %v166
    %v183 = vpack.c.b16 %v169, %v168
    %v184 = vpack.c.b16 %v171, %v170
    %v185 = vpack.c.b16 %v173, %v172
    %v186 = vpack.c.b16 %v175, %v174
    %v187 = vpack.c.b16 %v177, %v176
    %v188 = vpack.c.b16 %v179, %v178
    %v189 = vpack.c.b16 %v181, %v180
    %v192 = vunpack.c.l.b16 %v52
    %v193 = vunpack.c.l.b16 %v53
    %v194 = vpack.c.b16 %v193, %v192
    %vm196 = vcmask 130048
    %v198 = vsel %vm196, %v182, 0
    %v201 = vsel %vm196, %v183, 0
    %v204 = vsel %vm196, %v184, 0
    %v207 = vsel %vm196, %v185, 0
    %v210 = vsel %vm196, %v186, 0
    %v213 = vsel %vm196, %v187, 0
    %v216 = vsel %vm196, %v188, 0
    %v219 = vsel %vm196, %v189, 0
    %221 = vmatprep.subr.bf16.mxu0 0
    %222 = vmatpush1.bf16.msra.mxu0 0
    %223 = vmatprep.subr.bf16.mxu0 0
    %224 = vmatpush1.bf16.msra.mxu0 0
    %225 = vmatprep.subr.bf16.mxu0 0
    %226 = vmatpush1.bf16.msra.mxu0 0
    %227 = vmatprep.subr.bf16.mxu0 0
    %228 = vmatpush1.bf16.msra.mxu0 0
    %229 = vmatprep.subr.bf16.mxu0 0
    %230 = vmatpush1.bf16.msra.mxu0 0
    %231 = vmatprep.subr.bf16.mxu0 0
    %232 = vmatpush1.bf16.msra.mxu0 0
    %233 = vmatprep.subr.bf16.mxu0 0
    %234 = vmatpush1.bf16.msra.mxu0 0
    %235 = vmatprep.subr.bf16.mxu0 0
    %236 = vmatpush1.bf16.msra.mxu0 %v194
    %237 = vmatprep.subr.bf16.mxu0 0
    %238 = vmatpush2.bf16.msra.mxu0 0
    %239 = vmatprep.subr.bf16.mxu0 0
    %240 = vmatpush2.bf16.msra.mxu0 0
    %241 = vmatprep.subr.bf16.mxu0 0
    %242 = vmatpush2.bf16.msra.mxu0 0
    %243 = vmatprep.subr.bf16.mxu0 0
    %244 = vmatpush2.bf16.msra.mxu0 0
    %245 = vmatprep.subr.bf16.mxu0 0
    %246 = vmatpush2.bf16.msra.mxu0 0
    %247 = vmatprep.subr.bf16.mxu0 0
    %248 = vmatpush2.bf16.msra.mxu0 0
    %249 = vmatprep.subr.bf16.mxu0 0
    %250 = vmatpush2.bf16.msra.mxu0 0
    %251 = vmatprep.subr.bf16.mxu0 0
    %252 = vmatpush2.bf16.msra.mxu0 0
    %253 = vmatprep.mubr.bf16.mxu0 0
    %254 = vmatmul.mubr.bf16.gmra.mxu0 %v198
    %v255 = vpop.f32.mrf.mxu0
    %v256 = vadd.f32 %v73, %v255
    %v257 = vpop.f32.mrf.mxu0
    %v258 = vpop.f32.mrf.mxu0
    %v259 = vadd.f32 %v78, %v258
    %v260 = vpop.f32.mrf.mxu0
    %261 = vmatprep.mubr.bf16.mxu0 0
    %262 = vmatmul.mubr.bf16.gmra.mxu0 %v201
    %v263 = vpop.f32.mrf.mxu0
    %v264 = vadd.f32 %v83, %v263
    %v265 = vpop.f32.mrf.mxu0
    %v266 = vpop.f32.mrf.mxu0
    %v267 = vadd.f32 %v88, %v266
    %v268 = vpop.f32.mrf.mxu0
    %269 = vmatprep.mubr.bf16.mxu0 0
    %270 = vmatmul.mubr.bf16.gmra.mxu0 %v204
    %v271 = vpop.f32.mrf.mxu0
    %v272 = vadd.f32 %v93, %v271
    %v273 = vpop.f32.mrf.mxu0
    %v274 = vpop.f32.mrf.mxu0
    %v275 = vadd.f32 %v98, %v274
    %v276 = vpop.f32.mrf.mxu0
    %277 = vmatprep.mubr.bf16.mxu0 0
    %278 = vmatmul.mubr.bf16.gmra.mxu0 %v207
    %v279 = vpop.f32.mrf.mxu0
    %v280 = vadd.f32 %v103, %v279
    %v281 = vpop.f32.mrf.mxu0
    %v282 = vpop.f32.mrf.mxu0
    %v283 = vadd.f32 %v108, %v282
    %v284 = vpop.f32.mrf.mxu0
    %285 = vmatprep.mubr.bf16.mxu0 0
    %286 = vmatmul.mubr.bf16.gmra.mxu0 %v210
    %v287 = vpop.f32.mrf.mxu0
    %v288 = vadd.f32 %v113, %v287
    %v289 = vpop.f32.mrf.mxu0
    %v290 = vpop.f32.mrf.mxu0
    %v291 = vadd.f32 %v118, %v290
    %v292 = vpop.f32.mrf.mxu0
    %293 = vmatprep.mubr.bf16.mxu0 0
    %294 = vmatmul.mubr.bf16.gmra.mxu0 %v213
    %v295 = vpop.f32.mrf.mxu0
    %v296 = vadd.f32 %v123, %v295
    %v297 = vpop.f32.mrf.mxu0
    %v298 = vpop.f32.mrf.mxu0
    %v299 = vadd.f32 %v128, %v298
    %v300 = vpop.f32.mrf.mxu0
    %301 = vmatprep.mubr.bf16.mxu0 0
    %302 = vmatmul.mubr.bf16.gmra.mxu0 %v216
    %v303 = vpop.f32.mrf.mxu0
    %v304 = vadd.f32 %v133, %v303
    %v305 = vpop.f32.mrf.mxu0
    %v306 = vpop.f32.mrf.mxu0
    %v307 = vadd.f32 %v138, %v306
    %v308 = vpop.f32.mrf.mxu0
    %309 = vmatprep.mubr.bf16.mxu0 0
    %310 = vmatmul.mubr.bf16.gmra.mxu0 %v219
    %v311 = vpop.f32.mrf.mxu0
    %v312 = vadd.f32 %v143, %v311
    %v313 = vpop.f32.mrf.mxu0
    %v314 = vpop.f32.mrf.mxu0
    %v315 = vadd.f32 %v148, %v314
    %v316 = vpop.f32.mrf.mxu0
    %317 = vdwg.mxu0
    %v318 = vmax.f32 %v256, 0.0
    %v319 = vmax.f32 %v259, 0.0
    %v320 = vmax.f32 %v264, 0.0
    %v321 = vmax.f32 %v267, 0.0
    %v322 = vmax.f32 %v272, 0.0
    %v323 = vmax.f32 %v275, 0.0
    %v324 = vmax.f32 %v280, 0.0
    %v325 = vmax.f32 %v283, 0.0
    %v326 = vmax.f32 %v288, 0.0
    %v327 = vmax.f32 %v291, 0.0
    %v328 = vmax.f32 %v296, 0.0
    %v329 = vmax.f32 %v299, 0.0
    %v330 = vmax.f32 %v304, 0.0
    %v331 = vmax.f32 %v307, 0.0
    %v332 = vmax.f32 %v312, 0.0
    %v333 = vmax.f32 %v315, 0.0
    %v334 = vld [vmem:[%s3] sm:$0xf]
    %v335 = vld [vmem:[%s3 + $0x4] sm:$0xf]
    %v336 = vld [vmem:[%s3 + $0x8] sm:$0xf]
    %v337 = vld [vmem:[%s3 + $0xc] sm:$0xf]
    %v338 = vld [vmem:[%s3 + $0x10] sm:$0xf]
    %v339 = vld [vmem:[%s3 + $0x14] sm:$0xf]
    %v340 = vld [vmem:[%s3 + $0x18] sm:$0xf]
    %v341 = vld [vmem:[%s3 + $0x1c] sm:$0xf]
    %v342 = vpack.c.bf16 %v319, %v318
    %v343 = vpack.c.bf16 %v321, %v320
    %v344 = vpack.c.bf16 %v323, %v322
    %v345 = vpack.c.bf16 %v325, %v324
    %v346 = vpack.c.bf16 %v327, %v326
    %v347 = vpack.c.bf16 %v329, %v328
    %v348 = vpack.c.bf16 %v331, %v330
    %v349 = vpack.c.bf16 %v333, %v332
    %v350 = vld [vmem:[%s4] sm:$0xff]
    %v351 = vld [vmem:[%s4 + $0x8] sm:$0xff]
    %v352 = vld [vmem:[%s4 + $0x10] sm:$0xff]
    %v353 = vld [vmem:[%s4 + $0x18] sm:$0xff]
    %v354 = vld [vmem:[%s4 + $0x20] sm:$0xff]
    %v355 = vld [vmem:[%s4 + $0x28] sm:$0xff]
    %v356 = vld [vmem:[%s4 + $0x30] sm:$0xff]
    %v357 = vld [vmem:[%s4 + $0x38] sm:$0xff]
    %359 = vset.pattern.permute.xlu0 0
    %360 = vperm.xlu0 %359, %v350
    %v361 = vpop.permute.xlu0 %360
    %364 = vset.pattern.permute.xlu0 0
    %365 = vperm.xlu0 %364, %v351
    %v366 = vpop.permute.xlu0 %365
    %369 = vset.pattern.permute.xlu0 0
    %370 = vperm.xlu0 %369, %v352
    %v371 = vpop.permute.xlu0 %370
    %374 = vset.pattern.permute.xlu0 0
    %375 = vperm.xlu0 %374, %v353
    %v376 = vpop.permute.xlu0 %375
    %379 = vset.pattern.permute.xlu0 0
    %380 = vperm.xlu0 %379, %v354
    %v381 = vpop.permute.xlu0 %380
    %384 = vset.pattern.permute.xlu0 0
    %385 = vperm.xlu0 %384, %v355
    %v386 = vpop.permute.xlu0 %385
    %389 = vset.pattern.permute.xlu0 0
    %390 = vperm.xlu0 %389, %v356
    %v391 = vpop.permute.xlu0 %390
    %394 = vset.pattern.permute.xlu0 0
    %395 = vperm.xlu0 %394, %v357
    %v396 = vpop.permute.xlu0 %395
    %v406 = vunpack.c.l.b16 %v334
    %v407 = vunpack.c.l.b16 %v335
    %v408 = vunpack.c.l.b16 %v336
    %v409 = vunpack.c.l.b16 %v337
    %v410 = vunpack.c.l.b16 %v338
    %v411 = vunpack.c.l.b16 %v339
    %v412 = vunpack.c.l.b16 %v340
    %v413 = vunpack.c.l.b16 %v341
    %v414 = vpack.c.b16 %v407, %v406
    %v415 = vpack.c.b16 %v409, %v408
    %v416 = vpack.c.b16 %v411, %v410
    %v417 = vpack.c.b16 %v413, %v412
    %422 = vmatprep.subr.bf16.mxu0 0
    %423 = vmatpush1.bf16.msra.mxu0 %v349
    %424 = vmatprep.subr.bf16.mxu0 0
    %425 = vmatpush1.bf16.msra.mxu0 %v348
    %426 = vmatprep.subr.bf16.mxu0 0
    %427 = vmatpush1.bf16.msra.mxu0 %v347
    %428 = vmatprep.subr.bf16.mxu0 0
    %429 = vmatpush1.bf16.msra.mxu0 %v346
    %430 = vmatprep.subr.bf16.mxu0 0
    %431 = vmatpush1.bf16.msra.mxu0 %v345
    %432 = vmatprep.subr.bf16.mxu0 0
    %433 = vmatpush1.bf16.msra.mxu0 %v344
    %434 = vmatprep.subr.bf16.mxu0 0
    %435 = vmatpush1.bf16.msra.mxu0 %v343
    %436 = vmatprep.subr.bf16.mxu0 0
    %437 = vmatpush1.bf16.msra.mxu0 %v342
    %438 = vmatprep.subr.bf16.mxu0 0
    %439 = vmatpush2.bf16.msra.mxu0 0
    %440 = vmatprep.subr.bf16.mxu0 0
    %441 = vmatpush2.bf16.msra.mxu0 0
    %442 = vmatprep.subr.bf16.mxu0 0
    %443 = vmatpush2.bf16.msra.mxu0 0
    %444 = vmatprep.subr.bf16.mxu0 0
    %445 = vmatpush2.bf16.msra.mxu0 0
    %446 = vmatprep.subr.bf16.mxu0 0
    %447 = vmatpush2.bf16.msra.mxu0 0
    %448 = vmatprep.subr.bf16.mxu0 0
    %449 = vmatpush2.bf16.msra.mxu0 0
    %450 = vmatprep.subr.bf16.mxu0 0
    %451 = vmatpush2.bf16.msra.mxu0 0
    %452 = vmatprep.subr.bf16.mxu0 0
    %453 = vmatpush2.bf16.msra.mxu0 0
    %454 = vmatprep.mubr.bf16.mxu0 0
    %455 = vmatmul.mubr.bf16.gmra.mxu0 %v414
    %v456 = vpop.f32.mrf.mxu0
    %v457 = vadd.f32 %v361, %v456
    %v458 = vpop.f32.mrf.mxu0
    %v459 = vpop.f32.mrf.mxu0
    %v460 = vadd.f32 %v366, %v459
    %v461 = vpop.f32.mrf.mxu0
    %462 = vmatprep.mubr.bf16.mxu0 0
    %463 = vmatmul.mubr.bf16.gmra.mxu0 %v415
    %v464 = vpop.f32.mrf.mxu0
    %v465 = vadd.f32 %v371, %v464
    %v466 = vpop.f32.mrf.mxu0
    %v467 = vpop.f32.mrf.mxu0
    %v468 = vadd.f32 %v376, %v467
    %v469 = vpop.f32.mrf.mxu0
    %470 = vmatprep.mubr.bf16.mxu0 0
    %471 = vmatmul.mubr.bf16.gmra.mxu0 %v416
    %v472 = vpop.f32.mrf.mxu0
    %v473 = vadd.f32 %v381, %v472
    %v474 = vpop.f32.mrf.mxu0
    %v475 = vpop.f32.mrf.mxu0
    %v476 = vadd.f32 %v386, %v475
    %v477 = vpop.f32.mrf.mxu0
    %478 = vmatprep.mubr.bf16.mxu0 0
    %479 = vmatmul.mubr.bf16.gmra.mxu0 %v417
    %v480 = vpop.f32.mrf.mxu0
    %v481 = vadd.f32 %v391, %v480
    %v482 = vpop.f32.mrf.mxu0
    %v483 = vpop.f32.mrf.mxu0
    %v484 = vadd.f32 %v396, %v483
    %v485 = vpop.f32.mrf.mxu0
    %486 = vdwg.mxu0
    %v487 = vmax.f32 %v457, 0.0
    %v488 = vmax.f32 %v460, 0.0
    %v489 = vmax.f32 %v465, 0.0
    %v490 = vmax.f32 %v468, 0.0
    %v491 = vmax.f32 %v473, 0.0
    %v492 = vmax.f32 %v476, 0.0
    %v493 = vmax.f32 %v481, 0.0
    %v494 = vmax.f32 %v484, 0.0
    %v495 = vld [vmem:[%s5] sm:$0xf]
    %v496 = vld [vmem:[%s5 + $0x4] sm:$0xf]
    %v497 = vld [vmem:[%s5 + $0x8] sm:$0xf]
    %v498 = vld [vmem:[%s5 + $0xc] sm:$0xf]
    %v499 = vpack.c.bf16 %v488, %v487
    %v500 = vpack.c.bf16 %v490, %v489
    %v501 = vpack.c.bf16 %v492, %v491
    %v502 = vpack.c.bf16 %v494, %v493
    %v503 = vld [vmem:[%s6] sm:$0xff]
    %v504 = vld [vmem:[%s6 + $0x8] sm:$0xff]
    %v505 = vld [vmem:[%s6 + $0x10] sm:$0xff]
    %v506 = vld [vmem:[%s6 + $0x18] sm:$0xff]
    %508 = vset.pattern.permute.xlu0 0
    %509 = vperm.xlu0 %508, %v503
    %v510 = vpop.permute.xlu0 %509
    %513 = vset.pattern.permute.xlu0 0
    %514 = vperm.xlu0 %513, %v504
    %v515 = vpop.permute.xlu0 %514
    %518 = vset.pattern.permute.xlu0 0
    %519 = vperm.xlu0 %518, %v505
    %v520 = vpop.permute.xlu0 %519
    %523 = vset.pattern.permute.xlu0 0
    %524 = vperm.xlu0 %523, %v506
    %v525 = vpop.permute.xlu0 %524
    %v531 = vunpack.c.l.b16 %v495
    %v532 = vunpack.c.l.b16 %v496
    %v533 = vunpack.c.l.b16 %v497
    %v534 = vunpack.c.l.b16 %v498
    %v535 = vpack.c.b16 %v532, %v531
    %v536 = vpack.c.b16 %v534, %v533
    %vm537 = vcmask 523264
    %v539 = vsel %vm537, %v535, 0
    %v542 = vsel %vm537, %v536, 0
    %544 = vmatprep.subr.bf16.mxu0 0
    %545 = vmatpush1.bf16.msra.mxu0 0
    %546 = vmatprep.subr.bf16.mxu0 0
    %547 = vmatpush1.bf16.msra.mxu0 0
    %548 = vmatprep.subr.bf16.mxu0 0
    %549 = vmatpush1.bf16.msra.mxu0 0
    %550 = vmatprep.subr.bf16.mxu0 0
    %551 = vmatpush1.bf16.msra.mxu0 0
    %552 = vmatprep.subr.bf16.mxu0 0
    %553 = vmatpush1.bf16.msra.mxu0 %v502
    %554 = vmatprep.subr.bf16.mxu0 0
    %555 = vmatpush1.bf16.msra.mxu0 %v501
    %556 = vmatprep.subr.bf16.mxu0 0
    %557 = vmatpush1.bf16.msra.mxu0 %v500
    %558 = vmatprep.subr.bf16.mxu0 0
    %559 = vmatpush1.bf16.msra.mxu0 %v499
    %560 = vmatprep.subr.bf16.mxu0 0
    %561 = vmatpush2.bf16.msra.mxu0 0
    %562 = vmatprep.subr.bf16.mxu0 0
    %563 = vmatpush2.bf16.msra.mxu0 0
    %564 = vmatprep.subr.bf16.mxu0 0
    %565 = vmatpush2.bf16.msra.mxu0 0
    %566 = vmatprep.subr.bf16.mxu0 0
    %567 = vmatpush2.bf16.msra.mxu0 0
    %568 = vmatprep.subr.bf16.mxu0 0
    %569 = vmatpush2.bf16.msra.mxu0 0
    %570 = vmatprep.subr.bf16.mxu0 0
    %571 = vmatpush2.bf16.msra.mxu0 0
    %572 = vmatprep.subr.bf16.mxu0 0
    %573 = vmatpush2.bf16.msra.mxu0 0
    %574 = vmatprep.subr.bf16.mxu0 0
    %575 = vmatpush2.bf16.msra.mxu0 0
    %576 = vmatprep.mubr.bf16.mxu0 0
    %577 = vmatmul.mubr.bf16.gmra.mxu0 %v539
    %v578 = vpop.f32.mrf.mxu0
    %v579 = vadd.f32 %v510, %v578
    %v580 = vpop.f32.mrf.mxu0
    %v581 = vpop.f32.mrf.mxu0
    %v582 = vadd.f32 %v515, %v581
    %v583 = vpop.f32.mrf.mxu0
    %584 = vmatprep.mubr.bf16.mxu0 0
    %585 = vmatmul.mubr.bf16.gmra.mxu0 %v542
    %v586 = vpop.f32.mrf.mxu0
    %v587 = vadd.f32 %v520, %v586
    %v588 = vpop.f32.mrf.mxu0
    %v589 = vpop.f32.mrf.mxu0
    %v590 = vadd.f32 %v525, %v589
    %v591 = vpop.f32.mrf.mxu0
    %592 = vdwg.mxu0
    %v593 = vmax.f32 %v579, 0.0
    %v594 = vmax.f32 %v582, 0.0
    %v595 = vmax.f32 %v587, 0.0
    %v596 = vmax.f32 %v590, 0.0
    %v597 = vld [vmem:[%s7] sm:$0x1]
    %v598 = vpack.c.bf16 %v594, %v593
    %v599 = vpack.c.bf16 %v596, %v595
    %v600 = vld [vmem:[#allocation2] sm:$0x1]
    %602 = vset.pattern.permute.xlu0 0
    %603 = vperm.xlu0 %602, %v600
    %v604 = vpop.permute.xlu0 %603
    %v606 = vlaneseq
    %v607 = vshrl.u32 %v606, 7
    %v608 = vsub.s32 0, %v607
    %v609 = vrot.slane %v604, %v608
    %vm610 = vcmask 261120
    %v612 = vsel %vm610, %v597, 0
    %614 = vmatprep.subr.bf16.mxu0 0
    %615 = vmatpush1.bf16.msra.mxu0 0
    %616 = vmatprep.subr.bf16.mxu0 0
    %617 = vmatpush1.bf16.msra.mxu0 0
    %618 = vmatprep.subr.bf16.mxu0 0
    %619 = vmatpush1.bf16.msra.mxu0 0
    %620 = vmatprep.subr.bf16.mxu0 0
    %621 = vmatpush1.bf16.msra.mxu0 0
    %622 = vmatprep.subr.bf16.mxu0 0
    %623 = vmatpush1.bf16.msra.mxu0 0
    %624 = vmatprep.subr.bf16.mxu0 0
    %625 = vmatpush1.bf16.msra.mxu0 0
    %626 = vmatprep.subr.bf16.mxu0 0
    %627 = vmatpush1.bf16.msra.mxu0 %v599
    %628 = vmatprep.subr.bf16.mxu0 0
    %629 = vmatpush1.bf16.msra.mxu0 %v598
    %630 = vmatprep.subr.bf16.mxu0 0
    %631 = vmatpush2.bf16.msra.mxu0 0
    %632 = vmatprep.subr.bf16.mxu0 0
    %633 = vmatpush2.bf16.msra.mxu0 0
    %634 = vmatprep.subr.bf16.mxu0 0
    %635 = vmatpush2.bf16.msra.mxu0 0
    %636 = vmatprep.subr.bf16.mxu0 0
    %637 = vmatpush2.bf16.msra.mxu0 0
    %638 = vmatprep.subr.bf16.mxu0 0
    %639 = vmatpush2.bf16.msra.mxu0 0
    %640 = vmatprep.subr.bf16.mxu0 0
    %641 = vmatpush2.bf16.msra.mxu0 0
    %642 = vmatprep.subr.bf16.mxu0 0
    %643 = vmatpush2.bf16.msra.mxu0 0
    %644 = vmatprep.subr.bf16.mxu0 0
    %645 = vmatpush2.bf16.msra.mxu0 0
    %646 = vmatprep.mubr.bf16.mxu0 0
    %647 = vmatmul.mubr.bf16.gmra.mxu0 %v612
    %v648 = vpop.f32.mrf.mxu0
    %v649 = vadd.f32 %v609, %v648
    %v650 = vpop.f32.mrf.mxu0
    %v651 = vpop.f32.mrf.mxu0
    %v652 = vpop.f32.mrf.mxu0
    %653 = vdwg.mxu0
    %v654 = vsub.f32 0.0, %v649
    %v655 = vmul.f32 %v654, 1.442695
    %v656 = vpow.pop %v655
    %v657 = vadd.f32 %v656, 1.0
    %v658 = vrcp.pop %v657
    %659 = vst [vmem:[#allocation3] sm:$0x1] %v658
    // Predicated region
    $region38: #{tpu_custom_call.1} parent=1 // pred_check
      _
    $region39: #{tpu_custom_call.1} parent=1 // pred_check_branch
      %661 = sbr.rel (0) target = $region41
    $region40: #{tpu_custom_call.1} parent=1 // pred_region
      %s663 = ssub.s32 16, 16
      %664 = vsyncadd [#allocation4], %s663
      %s666 = sshll.u32 [#allocation3], 4
      %s667 = int_to_ptr.vmem [resolvable:$true] %s666
      %669 = dma.vmem_to_hbm [thread:$0]  %s667, 16, %s9, [#allocation4]
    $region41: #{tpu_custom_call.1} parent=1 // pred_fallthru
      _
    // Predicated region
    $region42: #{tpu_custom_call.1} parent=1 // pred_check
      _
    $region43: #{tpu_custom_call.1} parent=1 // pred_check_branch
      %671 = sbr.rel (0) target = $region45
    $region44: #{tpu_custom_call.1} parent=1 // pred_region
      %672 = dma.done [#allocation4], 16
    $region45: #{tpu_custom_call.1} parent=1 // pred_fallthru
      _
    %673 = vsyncpa [#allocation4], 1

</llo_original>
